<compile_context>
chip_gen: v7x
topology: tpu7x:2x2x1
jax: 0.10.0
libtpu: 0.0.40
codegen_flags: <defaults>
</compile_context>

<pallas_src>
import functools

import jax
import jax.numpy as jnp
from jax import lax
from jax.experimental import pallas as pl
from jax.experimental.pallas import tpu as pltpu


def head_attention_kernel(x_ref, wqkv_ref, bqkv_ref, out_ref, *, head_size):
    """One block of batch elements of Head.forward.

    x_ref    : (Bb, T, D)    input activations
    wqkv_ref : (D, 3*hs)     fused Q/K/V projection weights
    bqkv_ref : (1, 3*hs)     fused Q/K/V projection biases
    out_ref  : (Bb, T, hs)   attention output
    """
    hs = head_size
    x = x_ref[...]
    Bb, T, D = x.shape
    scale = hs ** (-0.5)

    # ---- fused Q/K/V projection: single well-shaped matmul over all Bb*T rows ----
    qkv = jnp.dot(x.reshape(Bb * T, D), wqkv_ref[...],
                  preferred_element_type=jnp.float32) + bqkv_ref[...]
    qkv = qkv.reshape(Bb, T, 3 * hs)
    q = qkv[:, :, 0 * hs:1 * hs]
    k = qkv[:, :, 1 * hs:2 * hs]
    v = qkv[:, :, 2 * hs:3 * hs]

    # ---- scaled dot-product attention with causal (tril) mask ----
    att = jnp.einsum("bqd,bkd->bqk", q, k,
                     preferred_element_type=jnp.float32) * scale
    row = lax.broadcasted_iota(jnp.int32, (Bb, T, T), 1)
    col = lax.broadcasted_iota(jnp.int32, (Bb, T, T), 2)
    att = jnp.where(col <= row, att, -1e30)      # finite sentinel instead of -inf

    att = att - jnp.max(att, axis=-1, keepdims=True)
    p = jnp.exp(att)
    denom = jnp.sum(p, axis=-1, keepdims=True)
    p = p * pl.reciprocal(denom, approx=True)    # EUP reciprocal, free slot
    # attention dropout: inference mode -> identity

    out = jnp.einsum("bqk,bkd->bqd", p, v, preferred_element_type=jnp.float32)
    out_ref[...] = out.astype(out_ref.dtype)


def head_forward(x, wqkv, bqkv, head_size, *, block_b=1):
    """pallas_call wrapper. Grid over the batch axis (parallel across TensorCores)."""
    B, T, D = x.shape
    assert B % block_b == 0, "block_b must divide the batch size"
    kernel = functools.partial(head_attention_kernel, head_size=head_size)

    return pl.pallas_call(
        kernel,
        out_shape=jax.ShapeDtypeStruct((B, T, head_size), jnp.float32),
        grid_spec=pltpu.PrefetchScalarGridSpec(
            num_scalar_prefetch=0,
            grid=(B // block_b,),
            in_specs=[
                pl.BlockSpec((block_b, T, D), lambda b: (b, 0, 0)),
                pl.BlockSpec((D, 3 * head_size), lambda b: (0, 0)),
                pl.BlockSpec((1, 3 * head_size), lambda b: (0, 0)),
            ],
            out_specs=pl.BlockSpec((block_b, T, head_size), lambda b: (b, 0, 0)),
        ),
        compiler_params=pltpu.CompilerParams(
            dimension_semantics=("parallel",),
        ),
    )(x, wqkv, bqkv)


def head_reference(x, wqkv, bqkv, head_size):
    """Pure-JAX mirror of PyTorch Head.forward (inference mode)."""
    hs = head_size
    T = x.shape[1]
    q = x @ wqkv[:, 0 * hs:1 * hs] + bqkv[0, 0 * hs:1 * hs]
    k = x @ wqkv[:, 1 * hs:2 * hs] + bqkv[0, 1 * hs:2 * hs]
    v = x @ wqkv[:, 2 * hs:3 * hs] + bqkv[0, 2 * hs:3 * hs]
    att = jnp.einsum("btd,bsd->bts", q, k) * hs ** (-0.5)
    mask = jnp.tril(jnp.ones((T, T), dtype=bool))
    att = jnp.where(mask, att, -jnp.inf)
    att = jax.nn.softmax(att, axis=-1)
    # dropout: identity (inference)
    return jnp.einsum("bts,bsd->btd", att, v)


if __name__ == "__main__":
    # config implied by the module: n_embd=32, cw_size=8 (=> T=8), head_size=8, batch=2
    B, T, D, HS = 2, 8, 32, 8

    key = jax.random.PRNGKey(0)
    kq, kk, kv, kbq, kbk, kbv, kx = jax.random.split(key, 7)
    s = 0.05
    # Separate Linear params, exactly as the PyTorch module holds them ...
    wq = s * jax.random.normal(kq, (D, HS), jnp.float32)
    wk = s * jax.random.normal(kk, (D, HS), jnp.float32)
    wv = s * jax.random.normal(kv, (D, HS), jnp.float32)
    bq = s * jax.random.normal(kbq, (HS,), jnp.float32)
    bk = s * jax.random.normal(kbk, (HS,), jnp.float32)
    bv = s * jax.random.normal(kbv, (HS,), jnp.float32)
    # ... packed host-side into one fused QKV weight/bias (fewer kernel inputs, 1 matmul)
    wqkv = jnp.concatenate([wq, wk, wv], axis=1)       # (D, 3*hs)
    bqkv = jnp.concatenate([bq, bk, bv])[None, :]      # (1, 3*hs)

    x = jax.random.normal(kx, (B, T, D), jnp.float32)

    out = head_forward(x, wqkv, bqkv, HS, block_b=1)
    out = jax.block_until_ready(out)

    ref = head_reference(x, wqkv, bqkv, HS)
    assert out.shape == (B, T, HS)
    max_err = jnp.max(jnp.abs(out - ref))
    assert jnp.allclose(out, ref, rtol=2e-3, atol=2e-3), f"max abs err = {max_err}"
    print("KERNEL_OK")
</pallas_src>

<mosaic_0001>
module attributes {stable_mosaic.version = 11 : i64} {
  func.func @head_attention_kernel(%arg0: i32, %arg1: memref<1x8x32xf32, #tpu.memory_space<vmem>>, %arg2: memref<32x24xf32, #tpu.memory_space<vmem>>, %arg3: memref<1x24xf32, #tpu.memory_space<vmem>>, %arg4: memref<1x8x8xf32, #tpu.memory_space<vmem>>) attributes {dimension_semantics = [#tpu.dimension_semantics<parallel>], iteration_bounds = array<i64: 2>, scalar_prefetch = 0 : i64, scratch_operands = 0 : i64, tpu.core_type = #tpu.core_type<tc>, window_params = [{transform_indices = @transform_0, window_bounds = array<i64: 1, 8, 32>}, {pipeline_mode = #tpu.pipeline_mode<synchronous>, transform_indices = @transform_1, window_bounds = array<i64: 32, 24>}, {pipeline_mode = #tpu.pipeline_mode<synchronous>, transform_indices = @transform_2, window_bounds = array<i64: 1, 24>}, {transform_indices = @transform_3, window_bounds = array<i64: 1, 8, 8>}]} {
    %c0 = arith.constant 0 : index
    %c0_0 = arith.constant 0 : index
    %c0_1 = arith.constant 0 : index
    %0 = vector.load %arg1[%c0, %c0_0, %c0_1] : memref<1x8x32xf32, #tpu.memory_space<vmem>>, vector<1x8x32xf32>
    %1 = vector.shape_cast %0 : vector<1x8x32xf32> to vector<8x32xf32>
    %c0_2 = arith.constant 0 : index
    %c0_3 = arith.constant 0 : index
    %2 = vector.load %arg2[%c0_2, %c0_3] : memref<32x24xf32, #tpu.memory_space<vmem>>, vector<32x24xf32>
    %cst = arith.constant dense<0.000000e+00> : vector<8x24xf32>
    %3 = tpu.matmul %1, %2, %cst {dimension_numbers = #tpu.dot_dimension_numbers<[1], [0], [0], [1], [0, 0, 1, 1], [], []>} : vector<8x32xf32>, vector<32x24xf32>, vector<8x24xf32> -> vector<8x24xf32>
    %c0_4 = arith.constant 0 : index
    %c0_5 = arith.constant 0 : index
    %4 = vector.load %arg3[%c0_4, %c0_5] : memref<1x24xf32, #tpu.memory_space<vmem>>, vector<1x24xf32>
    %5 = vector.broadcast %4 : vector<1x24xf32> to vector<8x24xf32>
    %6 = arith.addf %3, %5 : vector<8x24xf32>
    %7 = vector.shape_cast %6 : vector<8x24xf32> to vector<1x8x24xf32>
    %8 = vector.extract_strided_slice %7 {offsets = [0, 0, 0], sizes = [1, 8, 8], strides = [1, 1, 1]} : vector<1x8x24xf32> to vector<1x8x8xf32>
    %9 = vector.extract_strided_slice %7 {offsets = [0, 0, 8], sizes = [1, 8, 8], strides = [1, 1, 1]} : vector<1x8x24xf32> to vector<1x8x8xf32>
    %10 = vector.extract_strided_slice %7 {offsets = [0, 0, 16], sizes = [1, 8, 8], strides = [1, 1, 1]} : vector<1x8x24xf32> to vector<1x8x8xf32>
    "tpu.trace_start"() <{level = 10 : i32, message = "bqd,bkd->bqk"}> : () -> ()
    %cst_6 = arith.constant dense<0.000000e+00> : vector<1x8x8xf32>
    %11 = tpu.matmul %8, %9, %cst_6 {dimension_numbers = #tpu.dot_dimension_numbers<[2], [2], [1], [1], [0, 0, 0, 1, 1, 1], [0], [0]>} : vector<1x8x8xf32>, vector<1x8x8xf32>, vector<1x8x8xf32> -> vector<1x8x8xf32>
    "tpu.trace_stop"() : () -> ()
    %cst_7 = arith.constant 0.353553385 : f32
    %12 = vector.broadcast %cst_7 : f32 to vector<1x8x8xf32>
    %13 = arith.mulf %11, %12 : vector<1x8x8xf32>
    %14 = tpu.iota {dimensions = array<i32: 1>} : vector<1x8x8xi32>
    %15 = tpu.iota {dimensions = array<i32: 2>} : vector<1x8x8xi32>
    %16 = arith.cmpi sle, %15, %14 : vector<1x8x8xi32>
    %cst_8 = arith.constant -1.000000e+30 : f32
    %17 = vector.broadcast %cst_8 : f32 to vector<1x8x8xf32>
    %18 = arith.select %16, %13, %17 : vector<1x8x8xi1>, vector<1x8x8xf32>
    %cst_9 = arith.constant dense<0xFF800000> : vector<1x8xf32>
    %19 = vector.multi_reduction <maximumf>, %18, %cst_9 [2] : vector<1x8x8xf32> to vector<1x8xf32>
    %20 = vector.shape_cast %19 : vector<1x8xf32> to vector<1x8x1xf32>
    %21 = vector.broadcast %20 : vector<1x8x1xf32> to vector<1x8x8xf32>
    %22 = arith.subf %18, %21 : vector<1x8x8xf32>
    %23 = math.exp %22 : vector<1x8x8xf32>
    %cst_10 = arith.constant dense<0.000000e+00> : vector<1x8xf32>
    %24 = vector.multi_reduction <add>, %23, %cst_10 [2] : vector<1x8x8xf32> to vector<1x8xf32>
    %25 = vector.shape_cast %24 : vector<1x8xf32> to vector<1x8x1xf32>
    %26 = tpu.reciprocal %25 {approx = true} : vector<1x8x1xf32> -> vector<1x8x1xf32>
    %27 = vector.broadcast %26 : vector<1x8x1xf32> to vector<1x8x8xf32>
    %28 = arith.mulf %23, %27 : vector<1x8x8xf32>
    "tpu.trace_start"() <{level = 10 : i32, message = "bqk,bkd->bqd"}> : () -> ()
    %cst_11 = arith.constant dense<0.000000e+00> : vector<1x8x8xf32>
    %29 = tpu.matmul %28, %10, %cst_11 {dimension_numbers = #tpu.dot_dimension_numbers<[2], [1], [1], [2], [0, 0, 0, 1, 1, 2], [0], [0]>} : vector<1x8x8xf32>, vector<1x8x8xf32>, vector<1x8x8xf32> -> vector<1x8x8xf32>
    "tpu.trace_stop"() : () -> ()
    %c0_12 = arith.constant 0 : index
    %c0_13 = arith.constant 0 : index
    %c0_14 = arith.constant 0 : index
    %30 = vector.load %arg4[%c0_12, %c0_13, %c0_14] : memref<1x8x8xf32, #tpu.memory_space<vmem>>, vector<1x8x8xf32>
    tpu.vector_store %arg4[%c0_12, %c0_13, %c0_14], %29 {strides = array<i32>} : memref<1x8x8xf32, #tpu.memory_space<vmem>>, vector<1x8x8xf32>,
    return
  }
  func.func @transform_0(%arg0: i32) -> (i32, i32, i32) {
    %c0_i32 = arith.constant 0 : i32
    %c0_i32_0 = arith.constant 0 : i32
    %c0_i32_1 = arith.constant 0 : i32
    return %arg0, %c0_i32, %c0_i32_0 : i32, i32, i32
  }
  func.func @transform_1(%arg0: i32) -> (i32, i32) {
    %c0_i32 = arith.constant 0 : i32
    %c0_i32_0 = arith.constant 0 : i32
    %c0_i32_1 = arith.constant 0 : i32
    return %c0_i32, %c0_i32_0 : i32, i32
  }
  func.func @transform_2(%arg0: i32) -> (i32, i32) {
    %c0_i32 = arith.constant 0 : i32
    %c0_i32_0 = arith.constant 0 : i32
    %c0_i32_1 = arith.constant 0 : i32
    return %c0_i32, %c0_i32_0 : i32, i32
  }
  func.func @transform_3(%arg0: i32) -> (i32, i32, i32) {
    %c0_i32 = arith.constant 0 : i32
    %c0_i32_0 = arith.constant 0 : i32
    %c0_i32_1 = arith.constant 0 : i32
    return %arg0, %c0_i32, %c0_i32_0 : i32, i32, i32
  }
}

</mosaic_0001>

<llo_original>
// kernel: tpu_custom_call.1
$region0: #{tpu_custom_call.1}
  #allocation0 [shape = 'u32[]', space=smem, size = 0x4, offset = 0x4, fixed_abs, tag = 'smem constant byte address 0x4 - core index']
  #allocation1 [shape = 'u32[144,128]{1,0:T(1,128)}', space=vmem, size = 0x12000, scoped, tag = 'internal scratch']
  %s0 = inlined_call_operand.vmem [shape: f32[2,8,32], index: 0, kind: input, shape index: {}]
  %s1 = inlined_call_operand.vmem [shape: f32[32,24], index: 1, kind: input, shape index: {}]
  %s2 = inlined_call_operand.vmem [shape: f32[1,24], index: 2, kind: input, shape index: {}]
  %s3 = inlined_call_operand.hbm [shape: f32[2,8,8], index: 3, kind: output, shape index: {}]
  %s4 = sld [smem:[#allocation0]]
  $region45: #{tpu_custom_call.1} parent=0
    _
  %s6 = ssub.s32 1, %s4
  %s7 = scalar_select 0, %s6, %s4
  $region1: #{tpu_custom_call.1} parent=0
    #allocation2 [shape = 'u8[8192]{0}', space=vmem, size = 0x2000, scoped, tag = 'output window, operand 0']
    #allocation3 [shape = 's32[2]{0}', space=sflag, size = 0x8, scoped, tag = 'scoped memory for tpu_custom_call.1']
    %8 = vsyncpa [#allocation3], 0
    %s9 = scalar_lea.sflag [#allocation3], 1
    %10 = vsyncpa %s9, 0
    loop: start=0, step=1, limit=4
    $region2: #{tpu_custom_call.1} parent=1 // loop_pre_header
      _
    $region3: #{tpu_custom_call.1} parent=1 // loop_header
      %s12 = sphi 0, %s16
      %p13 = scmp.ge.s32.totalorder %s12, 4
      %s22 = sphi 0, %s24
      %s25 = sphi 0, %s22
      %s26 = sphi 0, %s25
      %s42 = sphi 0, %s26
      %s46 = sphi 0, %s46
      %s48 = sphi 0, %s46
      %s49 = sphi 0, %s48
      %s63 = sphi 0, %s49
      %s67 = sphi 0, %s67
      %s69 = sphi 0, %s67
      %s70 = sphi 0, %s69
      %s84 = sphi 0, %s70
      %s90 = sphi 0, %s92
      %s93 = sphi 0, %s90
      %s94 = sphi 0, %s93
      %s110 = sphi 0, %s94
    $region4: #{tpu_custom_call.1} parent=1 // loop_header_branch
      %15 = sbr.rel (%p13) target = $region8
    $region5: #{tpu_custom_call.1} parent=1 // loop_body
      %s17 = ssub.s32 %s12, 1
      %s18 = ssub.s32 %s12, 2
      %s19 = sadd.s32 %s12, 1
      %s20 = ssub.s32 %s12, %s19
      %p21 = scmp.eq.s32.totalorder %s20, 0
      %s23 = sadd.s32 %s22, 1
      %s24 = scalar_select %p21, %s22, %s23
      %p27 = pneg %p21
      %p28 = scmp.eq.s32.totalorder %s12, 1
      %p29 = por %p27, %p28
      %p30 = scmp.ne.s32.totalorder %s22, %s25
      %p31 = scmp.eq.s32.totalorder %s12, 0
      %p32 = por %p30, %p31
      %p33 = scmp.ne.s32.totalorder %s22, %s25
      %p34 = scmp.eq.s32.totalorder %s17, 1
      %p35 = por %p33, %p34
      %p36 = scmp.ne.s32.totalorder %s25, %s26
      %p37 = scmp.eq.s32.totalorder %s17, 0
      %p38 = por %p36, %p37
      %p39 = scmp.ne.s32.totalorder %s25, %s26
      %p40 = scmp.eq.s32.totalorder %s18, 1
      %p41 = por %p39, %p40
      %p43 = scmp.ne.s32.totalorder %s26, %s42
      %p44 = scmp.eq.s32.totalorder %s18, 0
      %p45 = por %p43, %p44
      %s47 = sadd.s32 %s46, 1
      %p50 = scmp.eq.s32.totalorder %s12, 1
      %p51 = scmp.ne.s32.totalorder %s46, %s48
      %p52 = scmp.eq.s32.totalorder %s12, 0
      %p53 = por %p51, %p52
      %p54 = scmp.ne.s32.totalorder %s46, %s48
      %p55 = scmp.eq.s32.totalorder %s17, 1
      %p56 = por %p54, %p55
      %p57 = scmp.ne.s32.totalorder %s48, %s49
      %p58 = scmp.eq.s32.totalorder %s17, 0
      %p59 = por %p57, %p58
      %p60 = scmp.ne.s32.totalorder %s48, %s49
      %p61 = scmp.eq.s32.totalorder %s18, 1
      %p62 = por %p60, %p61
      %p64 = scmp.ne.s32.totalorder %s49, %s63
      %p65 = scmp.eq.s32.totalorder %s18, 0
      %p66 = por %p64, %p65
      %s68 = sadd.s32 %s67, 1
      %p71 = scmp.eq.s32.totalorder %s12, 1
      %p72 = scmp.ne.s32.totalorder %s67, %s69
      %p73 = scmp.eq.s32.totalorder %s12, 0
      %p74 = por %p72, %p73
      %p75 = scmp.ne.s32.totalorder %s67, %s69
      %p76 = scmp.eq.s32.totalorder %s17, 1
      %p77 = por %p75, %p76
      %p78 = scmp.ne.s32.totalorder %s69, %s70
      %p79 = scmp.eq.s32.totalorder %s17, 0
      %p80 = por %p78, %p79
      %p81 = scmp.ne.s32.totalorder %s69, %s70
      %p82 = scmp.eq.s32.totalorder %s18, 1
      %p83 = por %p81, %p82
      %p85 = scmp.ne.s32.totalorder %s70, %s84
      %p86 = scmp.eq.s32.totalorder %s18, 0
      %p87 = por %p85, %p86
      %s88 = ssub.s32 %s12, %s19
      %p89 = scmp.eq.s32.totalorder %s88, 0
      %s91 = sadd.s32 %s90, 1
      %s92 = scalar_select %p89, %s90, %s91
      %p95 = pneg %p89
      %p96 = scmp.eq.s32.totalorder %s12, 1
      %p97 = por %p95, %p96
      %p98 = scmp.ne.s32.totalorder %s90, %s93
      %p99 = scmp.eq.s32.totalorder %s12, 0
      %p100 = por %p98, %p99
      %p101 = scmp.ne.s32.totalorder %s90, %s93
      %p102 = scmp.eq.s32.totalorder %s17, 1
      %p103 = por %p101, %p102
      %p104 = scmp.ne.s32.totalorder %s93, %s94
      %p105 = scmp.eq.s32.totalorder %s17, 0
      %p106 = por %p104, %p105
      %p107 = scmp.ne.s32.totalorder %s93, %s94
      %p108 = scmp.eq.s32.totalorder %s18, 1
      %p109 = por %p107, %p108
      %p111 = scmp.ne.s32.totalorder %s94, %s110
      %p112 = scmp.eq.s32.totalorder %s18, 0
      %p113 = por %p111, %p112
      %p114 = scmp.le.s32.totalorder 1, %s12
      %p115 = scmp.lt.s32.totalorder %s12, 3
      %p116 = pnand %p114, %p115
      %p117 = pneg %p116
      // Predicated region
      $region9: #{tpu_custom_call.1} parent=5 // pred_check
        _
      $region10: #{tpu_custom_call.1} parent=5 // pred_check_branch
        %119 = sbr.rel (%p116) target = $region12
      $region11: #{tpu_custom_call.1} parent=5 // pred_region
        %s120 = ssub.s32 %s12, 1
        // Predicated region
        $region13: #{tpu_custom_call.1} parent=11 // pred_check
          %p121 = pneg %p59
        $region14: #{tpu_custom_call.1} parent=11 // pred_check_branch
          %123 = sbr.rel (%p121) target = $region16
        $region15: #{tpu_custom_call.1} parent=11 // pred_region
          _
        $region16: #{tpu_custom_call.1} parent=11 // pred_fallthru
          _
        // Predicated region
        $region17: #{tpu_custom_call.1} parent=11 // pred_check
          %p124 = pneg %p80
        $region18: #{tpu_custom_call.1} parent=11 // pred_check_branch
          %126 = sbr.rel (%p124) target = $region20
        $region19: #{tpu_custom_call.1} parent=11 // pred_region
          _
        $region20: #{tpu_custom_call.1} parent=11 // pred_fallthru
          _
      $region12: #{tpu_custom_call.1} parent=5 // pred_fallthru
        _
      %p127 = scmp.lt.s32.totalorder %s12, 2
      // Predicated region
      $region21: #{tpu_custom_call.1} parent=5 // pred_check
        %p128 = pneg %p127
      $region22: #{tpu_custom_call.1} parent=5 // pred_check_branch
        %130 = sbr.rel (%p128) target = $region24
      $region23: #{tpu_custom_call.1} parent=5 // pred_region
        // Predicated region
        $region25: #{tpu_custom_call.1} parent=23 // pred_check
          %p131 = pneg %p32
        $region26: #{tpu_custom_call.1} parent=23 // pred_check_branch
          %133 = sbr.rel (%p131) target = $region28
        $region27: #{tpu_custom_call.1} parent=23 // pred_region
          %p134 = scmp.lt.s32.totalorder %s12, 1
          %s135 = scalar_select %p134, %s12, 1
          %s136 = smul.addr %s135, 8
          %s137 = scalar_lea.vmem %s0, %s136
        $region28: #{tpu_custom_call.1} parent=23 // pred_fallthru
          _
      $region24: #{tpu_custom_call.1} parent=5 // pred_fallthru
        _
      %p138 = scmp.le.s32.totalorder 1, %s12
      %p139 = scmp.lt.s32.totalorder %s12, 3
      %p140 = pnand %p138, %p139
      %p141 = pneg %p140
      // Predicated region
      $region29: #{tpu_custom_call.1} parent=5 // pred_check
        _
      $region30: #{tpu_custom_call.1} parent=5 // pred_check_branch
        %143 = sbr.rel (%p140) target = $region32
      $region31: #{tpu_custom_call.1} parent=5 // pred_region
        %s144 = ssub.s32 %s12, 1
        %p145 = scmp.lt.s32.totalorder %s17, 1
        %s146 = scalar_select %p145, %s17, 1
        %s147 = smul.addr %s146, 8
        %s148 = scalar_lea.vmem %s0, %s147
        %p149 = pneg %p38
        %p150 = pneg %p35
        %p151 = pneg %p59
        %p152 = pneg %p56
        %p153 = pneg %p80
        %p154 = pneg %p77
        %p155 = pneg %p106
        %p156 = pneg %p103
        %s157 = sand.u32 %s93, 1
        %s158 = scalar_lea.sflag [#allocation3], %s157
        %s159 = sand.u32 %s93, 1
        %s160 = smul.addr %s159, 8
        %s161 = scalar_lea.vmem [#allocation2], %s160
        %p162 = scmp.lt.s32.totalorder %s17, 1
        %s163 = scalar_select %p162, %s17, 1
        %s164 = smul.addr %s163, 8
        %s165 = scalar_lea.vmem %s0, %s164
        %v166 = vld [vmem:[%s165] sm:$0xff]
        %v167 = vld [vmem:[%s1] sm:$0xff]
        %v168 = vld [vmem:[%s1 + $0x8] sm:$0xff]
        %v169 = vld [vmem:[%s1 + $0x10] sm:$0xff]
        %v170 = vld [vmem:[%s1 + $0x18] sm:$0xff]
        %v171 = vld [vmem:[%s2] sm:$0x1]
        %v173 = vlaneseq
        %v174 = vshrl.u32 %v173, 7
        %v175 = vsub.s32 0, %v174
        %v176 = vrot.slane %v171, %v175
        %vm178 = vcmask 261120
        %v180 = vsel %vm178, %v166, 0
        %182 = vmatprep.subr.mxu0 0.0
        %183 = vmatpush1.msra.mxu0 %v167
        %184 = vmatprep.subr.mxu0 0.0
        %185 = vmatpush1.msra.mxu0 %v168
        %186 = vmatprep.subr.mxu0 0.0
        %187 = vmatpush1.msra.mxu0 %v169
        %188 = vmatprep.subr.mxu0 0.0
        %189 = vmatpush1.msra.mxu0 %v170
        %190 = vmatprep.subr.mxu0 0.0
        %191 = vmatpush1.msra.mxu0 0.0
        %192 = vmatprep.subr.mxu0 0.0
        %193 = vmatpush1.msra.mxu0 0.0
        %194 = vmatprep.subr.mxu0 0.0
        %195 = vmatpush1.msra.mxu0 0.0
        %196 = vmatprep.subr.mxu0 0.0
        %197 = vmatpush1.msra.mxu0 0.0
        %198 = vmatprep.subr.mxu0 0.0
        %199 = vmatpush1.msra.mxu0 0.0
        %200 = vmatprep.subr.mxu0 0.0
        %201 = vmatpush1.msra.mxu0 0.0
        %202 = vmatprep.subr.mxu0 0.0
        %203 = vmatpush1.msra.mxu0 0.0
        %204 = vmatprep.subr.mxu0 0.0
        %205 = vmatpush1.msra.mxu0 0.0
        %206 = vmatprep.subr.mxu0 0.0
        %207 = vmatpush1.msra.mxu0 0.0
        %208 = vmatprep.subr.mxu0 0.0
        %209 = vmatpush1.msra.mxu0 0.0
        %210 = vmatprep.subr.mxu0 0.0
        %211 = vmatpush1.msra.mxu0 0.0
        %212 = vmatprep.subr.mxu0 0.0
        %213 = vmatpush1.msra.mxu0 0.0
        %214 = vmatprep.subr.mxu0 0.0
        %215 = vmatpush1.msra.mxu0 0.0
        %216 = vmatprep.subr.mxu0 0.0
        %217 = vmatpush1.msra.mxu0 0.0
        %218 = vmatprep.subr.mxu0 0.0
        %219 = vmatpush1.msra.mxu0 0.0
        %220 = vmatprep.subr.mxu0 0.0
        %221 = vmatpush1.msra.mxu0 0.0
        %222 = vmatprep.subr.mxu0 0.0
        %223 = vmatpush1.msra.mxu0 0.0
        %224 = vmatprep.subr.mxu0 0.0
        %225 = vmatpush1.msra.mxu0 0.0
        %226 = vmatprep.subr.mxu0 0.0
        %227 = vmatpush1.msra.mxu0 0.0
        %228 = vmatprep.subr.mxu0 0.0
        %229 = vmatpush1.msra.mxu0 0.0
        %230 = vmatprep.subr.mxu0 0.0
        %231 = vmatpush1.msra.mxu0 0.0
        %232 = vmatprep.subr.mxu0 0.0
        %233 = vmatpush1.msra.mxu0 0.0
        %234 = vmatprep.subr.mxu0 0.0
        %235 = vmatpush1.msra.mxu0 0.0
        %236 = vmatprep.subr.mxu0 0.0
        %237 = vmatpush1.msra.mxu0 0.0
        %238 = vmatprep.subr.mxu0 0.0
        %239 = vmatpush1.msra.mxu0 0.0
        %240 = vmatprep.subr.mxu0 0.0
        %241 = vmatpush1.msra.mxu0 0.0
        %242 = vmatprep.subr.mxu0 0.0
        %243 = vmatpush1.msra.mxu0 0.0
        %244 = vmatprep.subr.mxu0 0.0
        %245 = vmatpush1.msra.mxu0 0.0
        %246 = vmatprep.mubr.f32.mxu0 0.0
        %247 = vmatmul.mubr.f32.gmra.mrb[0].mxu0 %v180
        %v248 = vpop.f32.mrb[0].mxu0
        %v249 = vadd.f32 %v176, %v248
        %v250 = vpop.f32.mrb[0].mxu0
        %251 = vdwg.mxu0
        %253 = vrot.lane.b32.xlu0 %v249, 120
        %v254 = vpop.permute.xlu0 %253
        %vm255 = vcmask 64512
        %v256 = vsel %vm255, %v249, 0
        %v258 = vsel %vm255, %v254, 0
        %260 = vmatprep.subr.mxu0 0.0
        %261 = vmatpush1.xpose.msra.mxu0 %v258
        %262 = vmatprep.subr.mxu0 0.0
        %263 = vmatpush1.xpose.msra.mxu0 0.0
        %264 = vmatprep.subr.mxu0 0.0
        %265 = vmatpush1.xpose.msra.mxu0 0.0
        %266 = vmatprep.subr.mxu0 0.0
        %267 = vmatpush1.xpose.msra.mxu0 0.0
        %268 = vmatprep.subr.mxu0 0.0
        %269 = vmatpush1.xpose.msra.mxu0 0.0
        %270 = vmatprep.subr.mxu0 0.0
        %271 = vmatpush1.xpose.msra.mxu0 0.0
        %272 = vmatprep.subr.mxu0 0.0
        %273 = vmatpush1.xpose.msra.mxu0 0.0
        %274 = vmatprep.subr.mxu0 0.0
        %275 = vmatpush1.xpose.msra.mxu0 0.0
        %276 = vmatprep.subr.mxu0 0.0
        %277 = vmatpush1.xpose.msra.mxu0 0.0
        %278 = vmatprep.subr.mxu0 0.0
        %279 = vmatpush1.xpose.msra.mxu0 0.0
        %280 = vmatprep.subr.mxu0 0.0
        %281 = vmatpush1.xpose.msra.mxu0 0.0
        %282 = vmatprep.subr.mxu0 0.0
        %283 = vmatpush1.xpose.msra.mxu0 0.0
        %284 = vmatprep.subr.mxu0 0.0
        %285 = vmatpush1.xpose.msra.mxu0 0.0
        %286 = vmatprep.subr.mxu0 0.0
        %287 = vmatpush1.xpose.msra.mxu0 0.0
        %288 = vmatprep.subr.mxu0 0.0
        %289 = vmatpush1.xpose.msra.mxu0 0.0
        %290 = vmatprep.subr.mxu0 0.0
        %291 = vmatpush1.xpose.msra.mxu0 0.0
        %292 = vmatprep.subr.mxu0 0.0
        %293 = vmatpush1.xpose.msra.mxu0 0.0
        %294 = vmatprep.subr.mxu0 0.0
        %295 = vmatpush1.xpose.msra.mxu0 0.0
        %296 = vmatprep.subr.mxu0 0.0
        %297 = vmatpush1.xpose.msra.mxu0 0.0
        %298 = vmatprep.subr.mxu0 0.0
        %299 = vmatpush1.xpose.msra.mxu0 0.0
        %300 = vmatprep.subr.mxu0 0.0
        %301 = vmatpush1.xpose.msra.mxu0 0.0
        %302 = vmatprep.subr.mxu0 0.0
        %303 = vmatpush1.xpose.msra.mxu0 0.0
        %304 = vmatprep.subr.mxu0 0.0
        %305 = vmatpush1.xpose.msra.mxu0 0.0
        %306 = vmatprep.subr.mxu0 0.0
        %307 = vmatpush1.xpose.msra.mxu0 0.0
        %308 = vmatprep.subr.mxu0 0.0
        %309 = vmatpush1.xpose.msra.mxu0 0.0
        %310 = vmatprep.subr.mxu0 0.0
        %311 = vmatpush1.xpose.msra.mxu0 0.0
        %312 = vmatprep.subr.mxu0 0.0
        %313 = vmatpush1.xpose.msra.mxu0 0.0
        %314 = vmatprep.subr.mxu0 0.0
        %315 = vmatpush1.xpose.msra.mxu0 0.0
        %316 = vmatprep.subr.mxu0 0.0
        %317 = vmatpush1.xpose.msra.mxu0 0.0
        %318 = vmatprep.subr.mxu0 0.0
        %319 = vmatpush1.xpose.msra.mxu0 0.0
        %320 = vmatprep.subr.mxu0 0.0
        %321 = vmatpush1.xpose.msra.mxu0 0.0
        %322 = vmatprep.subr.mxu0 0.0
        %323 = vmatpush1.xpose.msra.mxu0 0.0
        %324 = vmatprep.mubr.f32.mxu0 0.0
        %325 = vmatmul.mubr.f32.gmra.mrb[0].mxu0 %v256
        %v326 = vpop.f32.mrb[0].mxu0
        %v327 = vadd.f32 0.0, %v326
        %v328 = vpop.f32.mrb[0].mxu0
        %329 = vdwg.mxu0
        %v330 = vmul.f32 %v327, 0.35355338
        %v331 = vlaneseq
        %v332 = vshrl.u32 %v331, 7
        %v333 = vlaneseq
        %v334 = vand.u32 %v333, 127
        %vm335 = vcmp.le.s32.totalorder %v334, %v332
        %v336 = vsel %vm335, %v330, -1e+30
        %v337 = vsel %vm255, %v336, -inf
        %338 = vmax.xlane.f32.xlu0 %v337
        %v339 = vpop.xlane.xlu0 %338
        %v340 = vsub.f32 %v336, %v339
        %v341 = vmul.f32 %v340, 1.442695
        %v342 = vpow.pop %v341
        %v343 = vsel %vm255, %v342, 0.0
        %344 = vadd.xlane.f32.xlu0 %v343
        %v345 = vpop.xlane.xlu0 %344
        %v346 = vrcp.pop %v345
        %v347 = vmul.f32 %v342, %v346
        %348 = vrot.lane.b32.xlu0 %v249, 112
        %v349 = vpop.permute.xlu0 %348
        %v352 = vsel %vm255, %v347, 0
        %354 = vmatprep.subr.mxu0 0.0
        %355 = vmatpush1.msra.mxu0 %v349
        %356 = vmatprep.subr.mxu0 0.0
        %357 = vmatpush1.msra.mxu0 0.0
        %358 = vmatprep.subr.mxu0 0.0
        %359 = vmatpush1.msra.mxu0 0.0
        %360 = vmatprep.subr.mxu0 0.0
        %361 = vmatpush1.msra.mxu0 0.0
        %362 = vmatprep.subr.mxu0 0.0
        %363 = vmatpush1.msra.mxu0 0.0
        %364 = vmatprep.subr.mxu0 0.0
        %365 = vmatpush1.msra.mxu0 0.0
        %366 = vmatprep.subr.mxu0 0.0
        %367 = vmatpush1.msra.mxu0 0.0
        %368 = vmatprep.subr.mxu0 0.0
        %369 = vmatpush1.msra.mxu0 0.0
        %370 = vmatprep.subr.mxu0 0.0
        %371 = vmatpush1.msra.mxu0 0.0
        %372 = vmatprep.subr.mxu0 0.0
        %373 = vmatpush1.msra.mxu0 0.0
        %374 = vmatprep.subr.mxu0 0.0
        %375 = vmatpush1.msra.mxu0 0.0
        %376 = vmatprep.subr.mxu0 0.0
        %377 = vmatpush1.msra.mxu0 0.0
        %378 = vmatprep.subr.mxu0 0.0
        %379 = vmatpush1.msra.mxu0 0.0
        %380 = vmatprep.subr.mxu0 0.0
        %381 = vmatpush1.msra.mxu0 0.0
        %382 = vmatprep.subr.mxu0 0.0
        %383 = vmatpush1.msra.mxu0 0.0
        %384 = vmatprep.subr.mxu0 0.0
        %385 = vmatpush1.msra.mxu0 0.0
        %386 = vmatprep.subr.mxu0 0.0
        %387 = vmatpush1.msra.mxu0 0.0
        %388 = vmatprep.subr.mxu0 0.0
        %389 = vmatpush1.msra.mxu0 0.0
        %390 = vmatprep.subr.mxu0 0.0
        %391 = vmatpush1.msra.mxu0 0.0
        %392 = vmatprep.subr.mxu0 0.0
        %393 = vmatpush1.msra.mxu0 0.0
        %394 = vmatprep.subr.mxu0 0.0
        %395 = vmatpush1.msra.mxu0 0.0
        %396 = vmatprep.subr.mxu0 0.0
        %397 = vmatpush1.msra.mxu0 0.0
        %398 = vmatprep.subr.mxu0 0.0
        %399 = vmatpush1.msra.mxu0 0.0
        %400 = vmatprep.subr.mxu0 0.0
        %401 = vmatpush1.msra.mxu0 0.0
        %402 = vmatprep.subr.mxu0 0.0
        %403 = vmatpush1.msra.mxu0 0.0
        %404 = vmatprep.subr.mxu0 0.0
        %405 = vmatpush1.msra.mxu0 0.0
        %406 = vmatprep.subr.mxu0 0.0
        %407 = vmatpush1.msra.mxu0 0.0
        %408 = vmatprep.subr.mxu0 0.0
        %409 = vmatpush1.msra.mxu0 0.0
        %410 = vmatprep.subr.mxu0 0.0
        %411 = vmatpush1.msra.mxu0 0.0
        %412 = vmatprep.subr.mxu0 0.0
        %413 = vmatpush1.msra.mxu0 0.0
        %414 = vmatprep.subr.mxu0 0.0
        %415 = vmatpush1.msra.mxu0 0.0
        %416 = vmatprep.subr.mxu0 0.0
        %417 = vmatpush1.msra.mxu0 0.0
        %418 = vmatprep.mubr.f32.mxu0 0.0
        %419 = vmatmul.mubr.f32.gmra.mrb[0].mxu0 %v352
        %v420 = vpop.f32.mrb[0].mxu0
        %v421 = vadd.f32 0.0, %v420
        %v422 = vpop.f32.mrb[0].mxu0
        %423 = vdwg.mxu0
        %424 = vst.msk [vmem:[%s161] sm:$0xff] %vm255, %v421
        %s425 = sand.u32 %s93, 1
        %s426 = scalar_lea.sflag [#allocation3], %s425
        %s427 = sand.u32 %s93, 1
        %s428 = smul.addr %s427, 8
        %s429 = scalar_lea.vmem [#allocation2], %s428
        // Predicated region
        $region33: #{tpu_custom_call.1} parent=31 // pred_check
          %p430 = pneg %p103
        $region34: #{tpu_custom_call.1} parent=31 // pred_check_branch
          %432 = sbr.rel (%p430) target = $region36
        $region35: #{tpu_custom_call.1} parent=31 // pred_region
          %s434 = ssub.s32 128, 128
          %435 = vsyncadd %s426, %s434
          %s436 = smul.addr %s17, 128
          %s437 = scalar_lea.hbm %s3, %s436
          %s439 = sshll.u32 %s429, 4
          %s440 = int_to_ptr.vmem [resolvable:$true] %s439
          %442 = dma.vmem_to_hbm [thread:$0]  %s440, 128, %s437, %s426
        $region36: #{tpu_custom_call.1} parent=31 // pred_fallthru
          _
      $region32: #{tpu_custom_call.1} parent=5 // pred_fallthru
        _
      %p443 = scmp.le.s32.totalorder 2, %s12
      // Predicated region
      $region37: #{tpu_custom_call.1} parent=5 // pred_check
        %p444 = pneg %p443
      $region38: #{tpu_custom_call.1} parent=5 // pred_check_branch
        %446 = sbr.rel (%p444) target = $region40
      $region39: #{tpu_custom_call.1} parent=5 // pred_region
        %s447 = ssub.s32 %s12, 2
        // Predicated region
        $region41: #{tpu_custom_call.1} parent=39 // pred_check
          %p448 = pneg %p109
        $region42: #{tpu_custom_call.1} parent=39 // pred_check_branch
          %450 = sbr.rel (%p448) target = $region44
        $region43: #{tpu_custom_call.1} parent=39 // pred_region
          %s451 = sand.u32 %s94, 1
          %s452 = scalar_lea.sflag [#allocation3], %s451
          %s453 = sand.u32 %s94, 1
          %s454 = smul.addr %s453, 8
          %s455 = scalar_lea.vmem [#allocation2], %s454
          %456 = dma.done %s452, 128
        $region44: #{tpu_custom_call.1} parent=39 // pred_fallthru
          _
      $region40: #{tpu_custom_call.1} parent=5 // pred_fallthru
        _
    $region6: #{tpu_custom_call.1} parent=1 // loop_footer
      %s16 = sadd.s32 1, %s12
    $region7: #{tpu_custom_call.1} parent=1 // loop_footer_branch
      %11 = sbr.rel target = $region3
    $region8: #{tpu_custom_call.1} parent=1 // loop_exit
      _
    %457 = vsyncpa [#allocation3], 1
    %s458 = scalar_lea.sflag [#allocation3], 1
    %459 = vsyncpa %s458, 1

</llo_original>
